<compile_context>
chip_gen: v6e
topology: v6e:2x2x1
jax: 0.10.0
libtpu: 0.0.40
codegen_flags: <defaults>
</compile_context>

<pallas_src>
import jax
import jax.numpy as jnp
from jax.experimental import pallas as pl
from jax.experimental.pallas import tpu as pltpu

CLF_HIDDEN = 32
# v5e only: its MXU is 128 wide, so splitting the 192-wide gate matmul lets the
# r|z sigmoid (EUP) overlap the n-gate push.  Keep False on v6e/v7x (256-wide MXU).
SPLIT_GATE_MATMUL = False


def gru_classifier_kernel(
    x_flat_ref,    # (T*Bp, 8)   bf16  time-major, batch+K padded, flattened
    x_today_ref,   # (Bp, 1)     f32
    w_pack_ref,    # (8+2H, 3H)  bf16  rows [0:8]=W_i(pad) | [8:8+H]=W_h | [8+H:8+2H]=W1_h (lanes 0:32)
    vec_ref,       # (8, 3H)     f32   row0=b_x | row1=b_hn | row2=w1x | row3=b1 | row4=w2^T | row5=b2
    out_ref,       # (Bp, 1)     f32
    xproj_ref,     # (T*Bp, 3H)  f32   VMEM scratch: staged input projections
):
    Bp = x_today_ref.shape[0]
    H3 = vec_ref.shape[1]
    H = H3 // 3
    T = x_flat_ref.shape[0] // Bp

    # ---- Prologue: all T input-side gate projections in ONE bf16 MXU pass -----
    # (T*Bp, 8) @ (8, 3H) + b_x  ->  VMEM scratch (keeps vreg pressure low in the
    # unrolled recurrence; per-step re-load of an 8x192 slice is a few vld's).
    xproj_ref[...] = (
        jnp.dot(x_flat_ref[...], w_pack_ref[0:8, :],
                preferred_element_type=jnp.float32)
        + vec_ref[0:1, :]
    )

    w_h = w_pack_ref[8:8 + H, :]                                 # (H, 3H) bf16, held in ~6 vregs
    b_hn = jnp.broadcast_to(vec_ref[1:2, 0:H], (Bp, H))          # broadcast hoisted out of the loop

    # ---- Recurrence: fully unrolled (T static), bf16 MXU operands, f32 acc ----
    # NOTE: resident-RHS MXU driving (matmul_push_rhs/acc_lhs) intentionally not
    # used here -- see header comment.
    h = jnp.zeros((Bp, H), jnp.float32)
    for t in range(T):
        gi = xproj_ref[t * Bp:(t + 1) * Bp, :]                   # (Bp, 3H) static slice
        h16 = h.astype(jnp.bfloat16)
        if SPLIT_GATE_MATMUL:   # v5e: overlap r|z sigmoid with the n-gate push
            gh_rz = jnp.dot(h16, w_h[:, :2 * H], preferred_element_type=jnp.float32)
            gh_n = jnp.dot(h16, w_h[:, 2 * H:], preferred_element_type=jnp.float32)
        else:                   # v6e/v7x: 192-wide RHS fits one 256-wide MXU pass
            gh = jnp.dot(h16, w_h, preferred_element_type=jnp.float32)
            gh_rz = gh[:, :2 * H]
            gh_n = gh[:, 2 * H:]

        # r|z together: one 128-lane EUP sigmoid; r and n are lane-offset-0,
        # only z needs a 64-lane realign (short branch, overlaps r->tanh chain).
        rz = jax.nn.sigmoid(gi[:, :2 * H] + gh_rz)               # (Bp, 2H)
        r = rz[:, :H]
        z = rz[:, H:]
        n = jnp.tanh(gi[:, 2 * H:] + r * (gh_n + b_hn))          # (Bp, H)
        h = (1.0 - z) * n + z * h

    # ---- Classifier head (Dropout(p=0.5) is identity in eval mode) ------------
    # TODO(synk): training-mode RNG dropout not emitted.
    w1h = w_pack_ref[8 + H:8 + 2 * H, 0:CLF_HIDDEN]              # (H, 32) bf16
    hidden = (
        jnp.dot(h.astype(jnp.bfloat16), w1h, preferred_element_type=jnp.float32)
        + x_today_ref[...] * vec_ref[2:3, 0:CLF_HIDDEN]          # concat decomposed
        + vec_ref[3:4, 0:CLF_HIDDEN]
    )
    hidden = jnp.maximum(hidden, 0.0)
    # Final (Bp,32)@(32,1) as VPU multiply + lane reduce (MXU stays out of epilogue).
    out_ref[...] = (
        jnp.sum(hidden * vec_ref[4:5, 0:CLF_HIDDEN], axis=-1, keepdims=True)
        + vec_ref[5:6, 0:1]
    )


@jax.jit
def gru_forward(x_prev, x_today, w_pack, vec):
    B, T, I = x_prev.shape
    assert I <= 8, "input_size must fit the 8-column K padding"
    H = vec.shape[1] // 3
    Bp = max(8, ((B + 7) // 8) * 8)          # pad batch to full sublanes

    # batch_first -> time-major, zero-pad batch rows and K columns, flatten time.
    x_tbi = jnp.transpose(x_prev, (1, 0, 2)).astype(jnp.float32)        # (T, B, I)
    x_tbi = jnp.pad(x_tbi, ((0, 0), (0, Bp - B), (0, 8 - I)))           # (T, Bp, 8)
    x_flat = x_tbi.reshape(T * Bp, 8).astype(jnp.bfloat16)              # (T*Bp, 8)
    x_today_2d = jnp.pad(
        x_today.reshape(B, 1).astype(jnp.float32), ((0, Bp - B), (0, 0))
    )                                                                   # (Bp, 1)

    vmem = pl.BlockSpec(memory_space=pltpu.MemorySpace.VMEM)
    # Grid-less call: batch fits one 8-row sublane tile and total footprint is
    # <150 KiB (VMEM capacity is a non-issue on v5e/v6e/v7x).  If Bp ever grows,
    # add grid=(Bp//8,) with dimension_semantics=("parallel",) so v7x's two
    # TensorCores split the batch.
    out = pl.pallas_call(
        gru_classifier_kernel,
        out_shape=jax.ShapeDtypeStruct((Bp, 1), jnp.float32),
        in_specs=[vmem, vmem, vmem, vmem],
        out_specs=vmem,
        scratch_shapes=[pltpu.VMEM((T * Bp, 3 * H), jnp.float32)],
    )(x_flat, x_today_2d, w_pack, vec)
    return out[:B]                                                      # drop padded rows


def init_params(key, input_size=4, hidden_size=64, clf_hidden=CLF_HIDDEN):
    """Deterministic synthetic parameters, PyTorch-style uniform init scales."""
    I, H = input_size, hidden_size
    ks = jax.random.split(key, 16)
    kg = 1.0 / jnp.sqrt(H)           # nn.GRU init scale
    k1 = 1.0 / jnp.sqrt(H + 1)       # Linear(H+1, 32)
    k2 = 1.0 / jnp.sqrt(clf_hidden)  # Linear(32, 1)

    def u(k_, shape, scale):
        return jax.random.uniform(k_, shape, jnp.float32, -scale, scale)

    p = {
        # GRU gate weights stored already-transposed: x @ W (I,H), h @ W (H,H)
        "w_ir": u(ks[0], (I, H), kg), "w_iz": u(ks[1], (I, H), kg), "w_in": u(ks[2], (I, H), kg),
        "w_hr": u(ks[3], (H, H), kg), "w_hz": u(ks[4], (H, H), kg), "w_hn": u(ks[5], (H, H), kg),
        # b_r = b_ir + b_hr, b_z = b_iz + b_hz (valid fold); n-gate biases kept split
        "b_r": u(ks[6], (1, H), kg), "b_z": u(ks[7], (1, H), kg),
        "b_in": u(ks[8], (1, H), kg), "b_hn": u(ks[9], (1, H), kg),
    }
    w1 = u(ks[10], (H + 1, clf_hidden), k1)            # Linear(H+1, 32) weight (transposed)
    p["w1h"] = w1[:H, :]                               # (H, 32)
    p["w1x"] = w1[H:, :]                               # (1, 32)
    p["b1"] = u(ks[11], (1, clf_hidden), k1)           # (1, 32)
    p["w2"] = u(ks[12], (clf_hidden, 1), k2)           # (32, 1)
    p["b2"] = u(ks[13], (1, 1), k2)                    # (1, 1)
    p["_w1_full"] = w1                                 # reference-only
    return p


def pack_params(p, clf_hidden=CLF_HIDDEN):
    """Host-side packing: 9 parameter tensors -> 2 kernel refs (fewer entry DMAs).

    w_pack (bf16, (8+2H, 3H)): rows 0..7 = W_i zero-padded to 8 rows,
        rows 8..8+H-1 = W_h, rows 8+H..8+2H-1 = W1_h in lanes 0..31 (rest zero).
        All kernel slices start at sublane-tile boundaries and lane offset 0.
    vec (f32, (8, 3H)): row0=b_x_fused, row1=b_hn, row2=w1x, row3=b1,
        row4=w2^T, row5=b2 (all at lane offset 0).
    """
    I, H = p["w_ir"].shape
    H3 = 3 * H
    w_i = jnp.concatenate([p["w_ir"], p["w_iz"], p["w_in"]], axis=1)    # (I, 3H)
    w_h = jnp.concatenate([p["w_hr"], p["w_hz"], p["w_hn"]], axis=1)    # (H, 3H)
    w_i8 = jnp.zeros((8, H3), jnp.float32).at[:I, :].set(w_i)
    w1h_pad = jnp.zeros((H, H3), jnp.float32).at[:, :clf_hidden].set(p["w1h"])
    w_pack = jnp.concatenate([w_i8, w_h, w1h_pad], axis=0).astype(jnp.bfloat16)

    vec = jnp.zeros((8, H3), jnp.float32)
    vec = vec.at[0:1, :].set(jnp.concatenate([p["b_r"], p["b_z"], p["b_in"]], axis=1))
    vec = vec.at[1:2, :H].set(p["b_hn"])
    vec = vec.at[2:3, :clf_hidden].set(p["w1x"])
    vec = vec.at[3:4, :clf_hidden].set(p["b1"])
    vec = vec.at[4:5, :clf_hidden].set(p["w2"].T)
    vec = vec.at[5:6, :1].set(p["b2"])
    return w_pack, vec


def reference_forward(x_prev, x_today, params):
    """Pure-JAX f32 reference mirroring PyTorch nn.GRU (eval-mode) semantics."""
    B, T, I = x_prev.shape
    H = params["w_hr"].shape[0]
    h = jnp.zeros((B, H), jnp.float32)
    for t in range(T):
        x_t = x_prev[:, t, :]
        r = jax.nn.sigmoid(x_t @ params["w_ir"] + h @ params["w_hr"] + params["b_r"])
        z = jax.nn.sigmoid(x_t @ params["w_iz"] + h @ params["w_hz"] + params["b_z"])
        n = jnp.tanh(x_t @ params["w_in"] + params["b_in"]
                     + r * (h @ params["w_hn"] + params["b_hn"]))
        h = (1.0 - z) * n + z * h
    cat = jnp.concatenate([h, x_today.reshape(B, 1)], axis=1)          # (B, H+1)
    hid = jnp.maximum(cat @ params["_w1_full"] + params["b1"], 0.0)
    return hid @ params["w2"] + params["b2"]


if __name__ == "__main__":
    B, T, I, H = 2, 8, 4, 64
    key = jax.random.PRNGKey(0)
    k_x, k_t, k_p = jax.random.split(key, 3)

    x_prev = jax.random.normal(k_x, (B, T, I), jnp.float32)    # (batch, seq, input_size)
    x_today = jax.random.normal(k_t, (B,), jnp.float32)        # (batch,)
    params = init_params(k_p, input_size=I, hidden_size=H)
    w_pack, vec = pack_params(params)

    out = gru_forward(x_prev, x_today, w_pack, vec)
    out = jax.block_until_ready(out)

    ref = reference_forward(x_prev, x_today, params)
    assert out.shape == (B, 1), out.shape
    # bf16 MXU operands (f32 accumulation) vs. pure-f32 reference -> relaxed parity.
    assert jnp.allclose(out, ref, rtol=3e-2, atol=3e-2), (out, ref)

    print("KERNEL_OK")
</pallas_src>

<mosaic_0001>
module attributes {stable_mosaic.version = 11 : i64} {
  func.func @gru_classifier_kernel(%arg0: memref<64x8xbf16, #tpu.memory_space<vmem>>, %arg1: memref<8x1xf32, #tpu.memory_space<vmem>>, %arg2: memref<136x192xbf16, #tpu.memory_space<vmem>>, %arg3: memref<8x192xf32, #tpu.memory_space<vmem>>, %arg4: memref<8x1xf32, #tpu.memory_space<vmem>>, %arg5: memref<64x192xf32, #tpu.memory_space<vmem>>) attributes {dimension_semantics = [], scalar_prefetch = 0 : i64, scratch_operands = 1 : i64, tpu.core_type = #tpu.core_type<tc>} {
    %c0 = arith.constant 0 : index
    %c0_0 = arith.constant 0 : index
    %0 = vector.load %arg0[%c0, %c0_0] : memref<64x8xbf16, #tpu.memory_space<vmem>>, vector<64x8xbf16>
    %c0_1 = arith.constant 0 : index
    %c0_2 = arith.constant 0 : index
    %1 = vector.load %arg2[%c0_1, %c0_2] : memref<136x192xbf16, #tpu.memory_space<vmem>>, vector<8x192xbf16>
    %cst = arith.constant dense<0.000000e+00> : vector<64x192xf32>
    %2 = tpu.matmul %0, %1, %cst {dimension_numbers = #tpu.dot_dimension_numbers<[1], [0], [0], [1], [0, 0, 1, 1], [], []>} : vector<64x8xbf16>, vector<8x192xbf16>, vector<64x192xf32> -> vector<64x192xf32>
    %c0_3 = arith.constant 0 : index
    %c0_4 = arith.constant 0 : index
    %3 = vector.load %arg3[%c0_3, %c0_4] : memref<8x192xf32, #tpu.memory_space<vmem>>, vector<1x192xf32>
    %4 = vector.broadcast %3 : vector<1x192xf32> to vector<64x192xf32>
    %5 = arith.addf %2, %4 : vector<64x192xf32>
    %c0_5 = arith.constant 0 : index
    %c0_6 = arith.constant 0 : index
    %6 = vector.load %arg5[%c0_5, %c0_6] : memref<64x192xf32, #tpu.memory_space<vmem>>, vector<64x192xf32>
    tpu.vector_store %arg5[%c0_5, %c0_6], %5 {strides = array<i32>} : memref<64x192xf32, #tpu.memory_space<vmem>>, vector<64x192xf32>,
    %c8 = arith.constant 8 : index
    %c0_7 = arith.constant 0 : index
    %7 = vector.load %arg2[%c8, %c0_7] : memref<136x192xbf16, #tpu.memory_space<vmem>>, vector<64x192xbf16>
    %c1 = arith.constant 1 : index
    %c0_8 = arith.constant 0 : index
    %8 = vector.load %arg3[%c1, %c0_8] : memref<8x192xf32, #tpu.memory_space<vmem>>, vector<1x64xf32>
    %9 = vector.shape_cast %8 : vector<1x64xf32> to vector<1x64xf32>
    %10 = vector.broadcast %9 : vector<1x64xf32> to vector<8x64xf32>
    %cst_9 = arith.constant 0.000000e+00 : f32
    %11 = vector.broadcast %cst_9 : f32 to vector<8x64xf32>
    %c0_10 = arith.constant 0 : index
    %c0_11 = arith.constant 0 : index
    %12 = vector.load %arg5[%c0_10, %c0_11] : memref<64x192xf32, #tpu.memory_space<vmem>>, vector<8x192xf32>
    %13 = arith.truncf %11 : vector<8x64xf32> to vector<8x64xbf16>
    %cst_12 = arith.constant dense<0.000000e+00> : vector<8x192xf32>
    %14 = tpu.matmul %13, %7, %cst_12 {dimension_numbers = #tpu.dot_dimension_numbers<[1], [0], [0], [1], [0, 0, 1, 1], [], []>} : vector<8x64xbf16>, vector<64x192xbf16>, vector<8x192xf32> -> vector<8x192xf32>
    %15 = vector.extract_strided_slice %14 {offsets = [0, 0], sizes = [8, 128], strides = [1, 1]} : vector<8x192xf32> to vector<8x128xf32>
    %16 = vector.extract_strided_slice %14 {offsets = [0, 128], sizes = [8, 64], strides = [1, 1]} : vector<8x192xf32> to vector<8x64xf32>
    %17 = vector.extract_strided_slice %12 {offsets = [0, 0], sizes = [8, 128], strides = [1, 1]} : vector<8x192xf32> to vector<8x128xf32>
    %18 = arith.addf %17, %15 : vector<8x128xf32>
    %19 = arith.negf %18 : vector<8x128xf32>
    %20 = math.exp %19 : vector<8x128xf32>
    %cst_13 = arith.constant 1.000000e+00 : f32
    %21 = vector.broadcast %cst_13 : f32 to vector<8x128xf32>
    %22 = arith.addf %21, %20 : vector<8x128xf32>
    %23 = arith.divf %21, %22 : vector<8x128xf32>
    %24 = vector.extract_strided_slice %23 {offsets = [0, 0], sizes = [8, 64], strides = [1, 1]} : vector<8x128xf32> to vector<8x64xf32>
    %25 = vector.extract_strided_slice %23 {offsets = [0, 64], sizes = [8, 64], strides = [1, 1]} : vector<8x128xf32> to vector<8x64xf32>
    %26 = vector.extract_strided_slice %12 {offsets = [0, 128], sizes = [8, 64], strides = [1, 1]} : vector<8x192xf32> to vector<8x64xf32>
    %27 = arith.addf %16, %10 : vector<8x64xf32>
    %28 = arith.mulf %24, %27 : vector<8x64xf32>
    %29 = arith.addf %26, %28 : vector<8x64xf32>
    %30 = math.tanh %29 : vector<8x64xf32>
    %cst_14 = arith.constant 1.000000e+00 : f32
    %31 = vector.broadcast %cst_14 : f32 to vector<8x64xf32>
    %32 = arith.subf %31, %25 : vector<8x64xf32>
    %33 = arith.mulf %32, %30 : vector<8x64xf32>
    %34 = arith.mulf %25, %11 : vector<8x64xf32>
    %35 = arith.addf %33, %34 : vector<8x64xf32>
    %c8_15 = arith.constant 8 : index
    %c0_16 = arith.constant 0 : index
    %36 = vector.load %arg5[%c8_15, %c0_16] : memref<64x192xf32, #tpu.memory_space<vmem>>, vector<8x192xf32>
    %37 = arith.truncf %35 : vector<8x64xf32> to vector<8x64xbf16>
    %cst_17 = arith.constant dense<0.000000e+00> : vector<8x192xf32>
    %38 = tpu.matmul %37, %7, %cst_17 {dimension_numbers = #tpu.dot_dimension_numbers<[1], [0], [0], [1], [0, 0, 1, 1], [], []>} : vector<8x64xbf16>, vector<64x192xbf16>, vector<8x192xf32> -> vector<8x192xf32>
    %39 = vector.extract_strided_slice %38 {offsets = [0, 0], sizes = [8, 128], strides = [1, 1]} : vector<8x192xf32> to vector<8x128xf32>
    %40 = vector.extract_strided_slice %38 {offsets = [0, 128], sizes = [8, 64], strides = [1, 1]} : vector<8x192xf32> to vector<8x64xf32>
    %41 = vector.extract_strided_slice %36 {offsets = [0, 0], sizes = [8, 128], strides = [1, 1]} : vector<8x192xf32> to vector<8x128xf32>
    %42 = arith.addf %41, %39 : vector<8x128xf32>
    %43 = arith.negf %42 : vector<8x128xf32>
    %44 = math.exp %43 : vector<8x128xf32>
    %cst_18 = arith.constant 1.000000e+00 : f32
    %45 = vector.broadcast %cst_18 : f32 to vector<8x128xf32>
    %46 = arith.addf %45, %44 : vector<8x128xf32>
    %47 = arith.divf %45, %46 : vector<8x128xf32>
    %48 = vector.extract_strided_slice %47 {offsets = [0, 0], sizes = [8, 64], strides = [1, 1]} : vector<8x128xf32> to vector<8x64xf32>
    %49 = vector.extract_strided_slice %47 {offsets = [0, 64], sizes = [8, 64], strides = [1, 1]} : vector<8x128xf32> to vector<8x64xf32>
    %50 = vector.extract_strided_slice %36 {offsets = [0, 128], sizes = [8, 64], strides = [1, 1]} : vector<8x192xf32> to vector<8x64xf32>
    %51 = arith.addf %40, %10 : vector<8x64xf32>
    %52 = arith.mulf %48, %51 : vector<8x64xf32>
    %53 = arith.addf %50, %52 : vector<8x64xf32>
    %54 = math.tanh %53 : vector<8x64xf32>
    %cst_19 = arith.constant 1.000000e+00 : f32
    %55 = vector.broadcast %cst_19 : f32 to vector<8x64xf32>
    %56 = arith.subf %55, %49 : vector<8x64xf32>
    %57 = arith.mulf %56, %54 : vector<8x64xf32>
    %58 = arith.mulf %49, %35 : vector<8x64xf32>
    %59 = arith.addf %57, %58 : vector<8x64xf32>
    %c16 = arith.constant 16 : index
    %c0_20 = arith.constant 0 : index
    %60 = vector.load %arg5[%c16, %c0_20] : memref<64x192xf32, #tpu.memory_space<vmem>>, vector<8x192xf32>
    %61 = arith.truncf %59 : vector<8x64xf32> to vector<8x64xbf16>
    %cst_21 = arith.constant dense<0.000000e+00> : vector<8x192xf32>
    %62 = tpu.matmul %61, %7, %cst_21 {dimension_numbers = #tpu.dot_dimension_numbers<[1], [0], [0], [1], [0, 0, 1, 1], [], []>} : vector<8x64xbf16>, vector<64x192xbf16>, vector<8x192xf32> -> vector<8x192xf32>
    %63 = vector.extract_strided_slice %62 {offsets = [0, 0], sizes = [8, 128], strides = [1, 1]} : vector<8x192xf32> to vector<8x128xf32>
    %64 = vector.extract_strided_slice %62 {offsets = [0, 128], sizes = [8, 64], strides = [1, 1]} : vector<8x192xf32> to vector<8x64xf32>
    %65 = vector.extract_strided_slice %60 {offsets = [0, 0], sizes = [8, 128], strides = [1, 1]} : vector<8x192xf32> to vector<8x128xf32>
    %66 = arith.addf %65, %63 : vector<8x128xf32>
    %67 = arith.negf %66 : vector<8x128xf32>
    %68 = math.exp %67 : vector<8x128xf32>
    %cst_22 = arith.constant 1.000000e+00 : f32
    %69 = vector.broadcast %cst_22 : f32 to vector<8x128xf32>
    %70 = arith.addf %69, %68 : vector<8x128xf32>
    %71 = arith.divf %69, %70 : vector<8x128xf32>
    %72 = vector.extract_strided_slice %71 {offsets = [0, 0], sizes = [8, 64], strides = [1, 1]} : vector<8x128xf32> to vector<8x64xf32>
    %73 = vector.extract_strided_slice %71 {offsets = [0, 64], sizes = [8, 64], strides = [1, 1]} : vector<8x128xf32> to vector<8x64xf32>
    %74 = vector.extract_strided_slice %60 {offsets = [0, 128], sizes = [8, 64], strides = [1, 1]} : vector<8x192xf32> to vector<8x64xf32>
    %75 = arith.addf %64, %10 : vector<8x64xf32>
    %76 = arith.mulf %72, %75 : vector<8x64xf32>
    %77 = arith.addf %74, %76 : vector<8x64xf32>
    %78 = math.tanh %77 : vector<8x64xf32>
    %cst_23 = arith.constant 1.000000e+00 : f32
    %79 = vector.broadcast %cst_23 : f32 to vector<8x64xf32>
    %80 = arith.subf %79, %73 : vector<8x64xf32>
    %81 = arith.mulf %80, %78 : vector<8x64xf32>
    %82 = arith.mulf %73, %59 : vector<8x64xf32>
    %83 = arith.addf %81, %82 : vector<8x64xf32>
    %c24 = arith.constant 24 : index
    %c0_24 = arith.constant 0 : index
    %84 = vector.load %arg5[%c24, %c0_24] : memref<64x192xf32, #tpu.memory_space<vmem>>, vector<8x192xf32>
    %85 = arith.truncf %83 : vector<8x64xf32> to vector<8x64xbf16>
    %cst_25 = arith.constant dense<0.000000e+00> : vector<8x192xf32>
    %86 = tpu.matmul %85, %7, %cst_25 {dimension_numbers = #tpu.dot_dimension_numbers<[1], [0], [0], [1], [0, 0, 1, 1], [], []>} : vector<8x64xbf16>, vector<64x192xbf16>, vector<8x192xf32> -> vector<8x192xf32>
    %87 = vector.extract_strided_slice %86 {offsets = [0, 0], sizes = [8, 128], strides = [1, 1]} : vector<8x192xf32> to vector<8x128xf32>
    %88 = vector.extract_strided_slice %86 {offsets = [0, 128], sizes = [8, 64], strides = [1, 1]} : vector<8x192xf32> to vector<8x64xf32>
    %89 = vector.extract_strided_slice %84 {offsets = [0, 0], sizes = [8, 128], strides = [1, 1]} : vector<8x192xf32> to vector<8x128xf32>
    %90 = arith.addf %89, %87 : vector<8x128xf32>
    %91 = arith.negf %90 : vector<8x128xf32>
    %92 = math.exp %91 : vector<8x128xf32>
    %cst_26 = arith.constant 1.000000e+00 : f32
    %93 = vector.broadcast %cst_26 : f32 to vector<8x128xf32>
    %94 = arith.addf %93, %92 : vector<8x128xf32>
    %95 = arith.divf %93, %94 : vector<8x128xf32>
    %96 = vector.extract_strided_slice %95 {offsets = [0, 0], sizes = [8, 64], strides = [1, 1]} : vector<8x128xf32> to vector<8x64xf32>
    %97 = vector.extract_strided_slice %95 {offsets = [0, 64], sizes = [8, 64], strides = [1, 1]} : vector<8x128xf32> to vector<8x64xf32>
    %98 = vector.extract_strided_slice %84 {offsets = [0, 128], sizes = [8, 64], strides = [1, 1]} : vector<8x192xf32> to vector<8x64xf32>
    %99 = arith.addf %88, %10 : vector<8x64xf32>
    %100 = arith.mulf %96, %99 : vector<8x64xf32>
    %101 = arith.addf %98, %100 : vector<8x64xf32>
    %102 = math.tanh %101 : vector<8x64xf32>
    %cst_27 = arith.constant 1.000000e+00 : f32
    %103 = vector.broadcast %cst_27 : f32 to vector<8x64xf32>
    %104 = arith.subf %103, %97 : vector<8x64xf32>
    %105 = arith.mulf %104, %102 : vector<8x64xf32>
    %106 = arith.mulf %97, %83 : vector<8x64xf32>
    %107 = arith.addf %105, %106 : vector<8x64xf32>
    %c32 = arith.constant 32 : index
    %c0_28 = arith.constant 0 : index
    %108 = vector.load %arg5[%c32, %c0_28] : memref<64x192xf32, #tpu.memory_space<vmem>>, vector<8x192xf32>
    %109 = arith.truncf %107 : vector<8x64xf32> to vector<8x64xbf16>
    %cst_29 = arith.constant dense<0.000000e+00> : vector<8x192xf32>
    %110 = tpu.matmul %109, %7, %cst_29 {dimension_numbers = #tpu.dot_dimension_numbers<[1], [0], [0], [1], [0, 0, 1, 1], [], []>} : vector<8x64xbf16>, vector<64x192xbf16>, vector<8x192xf32> -> vector<8x192xf32>
    %111 = vector.extract_strided_slice %110 {offsets = [0, 0], sizes = [8, 128], strides = [1, 1]} : vector<8x192xf32> to vector<8x128xf32>
    %112 = vector.extract_strided_slice %110 {offsets = [0, 128], sizes = [8, 64], strides = [1, 1]} : vector<8x192xf32> to vector<8x64xf32>
    %113 = vector.extract_strided_slice %108 {offsets = [0, 0], sizes = [8, 128], strides = [1, 1]} : vector<8x192xf32> to vector<8x128xf32>
    %114 = arith.addf %113, %111 : vector<8x128xf32>
    %115 = arith.negf %114 : vector<8x128xf32>
    %116 = math.exp %115 : vector<8x128xf32>
    %cst_30 = arith.constant 1.000000e+00 : f32
    %117 = vector.broadcast %cst_30 : f32 to vector<8x128xf32>
    %118 = arith.addf %117, %116 : vector<8x128xf32>
    %119 = arith.divf %117, %118 : vector<8x128xf32>
    %120 = vector.extract_strided_slice %119 {offsets = [0, 0], sizes = [8, 64], strides = [1, 1]} : vector<8x128xf32> to vector<8x64xf32>
    %121 = vector.extract_strided_slice %119 {offsets = [0, 64], sizes = [8, 64], strides = [1, 1]} : vector<8x128xf32> to vector<8x64xf32>
    %122 = vector.extract_strided_slice %108 {offsets = [0, 128], sizes = [8, 64], strides = [1, 1]} : vector<8x192xf32> to vector<8x64xf32>
    %123 = arith.addf %112, %10 : vector<8x64xf32>
    %124 = arith.mulf %120, %123 : vector<8x64xf32>
    %125 = arith.addf %122, %124 : vector<8x64xf32>
    %126 = math.tanh %125 : vector<8x64xf32>
    %cst_31 = arith.constant 1.000000e+00 : f32
    %127 = vector.broadcast %cst_31 : f32 to vector<8x64xf32>
    %128 = arith.subf %127, %121 : vector<8x64xf32>
    %129 = arith.mulf %128, %126 : vector<8x64xf32>
    %130 = arith.mulf %121, %107 : vector<8x64xf32>
    %131 = arith.addf %129, %130 : vector<8x64xf32>
    %c40 = arith.constant 40 : index
    %c0_32 = arith.constant 0 : index
    %132 = vector.load %arg5[%c40, %c0_32] : memref<64x192xf32, #tpu.memory_space<vmem>>, vector<8x192xf32>
    %133 = arith.truncf %131 : vector<8x64xf32> to vector<8x64xbf16>
    %cst_33 = arith.constant dense<0.000000e+00> : vector<8x192xf32>
    %134 = tpu.matmul %133, %7, %cst_33 {dimension_numbers = #tpu.dot_dimension_numbers<[1], [0], [0], [1], [0, 0, 1, 1], [], []>} : vector<8x64xbf16>, vector<64x192xbf16>, vector<8x192xf32> -> vector<8x192xf32>
    %135 = vector.extract_strided_slice %134 {offsets = [0, 0], sizes = [8, 128], strides = [1, 1]} : vector<8x192xf32> to vector<8x128xf32>
    %136 = vector.extract_strided_slice %134 {offsets = [0, 128], sizes = [8, 64], strides = [1, 1]} : vector<8x192xf32> to vector<8x64xf32>
    %137 = vector.extract_strided_slice %132 {offsets = [0, 0], sizes = [8, 128], strides = [1, 1]} : vector<8x192xf32> to vector<8x128xf32>
    %138 = arith.addf %137, %135 : vector<8x128xf32>
    %139 = arith.negf %138 : vector<8x128xf32>
    %140 = math.exp %139 : vector<8x128xf32>
    %cst_34 = arith.constant 1.000000e+00 : f32
    %141 = vector.broadcast %cst_34 : f32 to vector<8x128xf32>
    %142 = arith.addf %141, %140 : vector<8x128xf32>
    %143 = arith.divf %141, %142 : vector<8x128xf32>
    %144 = vector.extract_strided_slice %143 {offsets = [0, 0], sizes = [8, 64], strides = [1, 1]} : vector<8x128xf32> to vector<8x64xf32>
    %145 = vector.extract_strided_slice %143 {offsets = [0, 64], sizes = [8, 64], strides = [1, 1]} : vector<8x128xf32> to vector<8x64xf32>
    %146 = vector.extract_strided_slice %132 {offsets = [0, 128], sizes = [8, 64], strides = [1, 1]} : vector<8x192xf32> to vector<8x64xf32>
    %147 = arith.addf %136, %10 : vector<8x64xf32>
    %148 = arith.mulf %144, %147 : vector<8x64xf32>
    %149 = arith.addf %146, %148 : vector<8x64xf32>
    %150 = math.tanh %149 : vector<8x64xf32>
    %cst_35 = arith.constant 1.000000e+00 : f32
    %151 = vector.broadcast %cst_35 : f32 to vector<8x64xf32>
    %152 = arith.subf %151, %145 : vector<8x64xf32>
    %153 = arith.mulf %152, %150 : vector<8x64xf32>
    %154 = arith.mulf %145, %131 : vector<8x64xf32>
    %155 = arith.addf %153, %154 : vector<8x64xf32>
    %c48 = arith.constant 48 : index
    %c0_36 = arith.constant 0 : index
    %156 = vector.load %arg5[%c48, %c0_36] : memref<64x192xf32, #tpu.memory_space<vmem>>, vector<8x192xf32>
    %157 = arith.truncf %155 : vector<8x64xf32> to vector<8x64xbf16>
    %cst_37 = arith.constant dense<0.000000e+00> : vector<8x192xf32>
    %158 = tpu.matmul %157, %7, %cst_37 {dimension_numbers = #tpu.dot_dimension_numbers<[1], [0], [0], [1], [0, 0, 1, 1], [], []>} : vector<8x64xbf16>, vector<64x192xbf16>, vector<8x192xf32> -> vector<8x192xf32>
    %159 = vector.extract_strided_slice %158 {offsets = [0, 0], sizes = [8, 128], strides = [1, 1]} : vector<8x192xf32> to vector<8x128xf32>
    %160 = vector.extract_strided_slice %158 {offsets = [0, 128], sizes = [8, 64], strides = [1, 1]} : vector<8x192xf32> to vector<8x64xf32>
    %161 = vector.extract_strided_slice %156 {offsets = [0, 0], sizes = [8, 128], strides = [1, 1]} : vector<8x192xf32> to vector<8x128xf32>
    %162 = arith.addf %161, %159 : vector<8x128xf32>
    %163 = arith.negf %162 : vector<8x128xf32>
    %164 = math.exp %163 : vector<8x128xf32>
    %cst_38 = arith.constant 1.000000e+00 : f32
    %165 = vector.broadcast %cst_38 : f32 to vector<8x128xf32>
    %166 = arith.addf %165, %164 : vector<8x128xf32>
    %167 = arith.divf %165, %166 : vector<8x128xf32>
    %168 = vector.extract_strided_slice %167 {offsets = [0, 0], sizes = [8, 64], strides = [1, 1]} : vector<8x128xf32> to vector<8x64xf32>
    %169 = vector.extract_strided_slice %167 {offsets = [0, 64], sizes = [8, 64], strides = [1, 1]} : vector<8x128xf32> to vector<8x64xf32>
    %170 = vector.extract_strided_slice %156 {offsets = [0, 128], sizes = [8, 64], strides = [1, 1]} : vector<8x192xf32> to vector<8x64xf32>
    %171 = arith.addf %160, %10 : vector<8x64xf32>
    %172 = arith.mulf %168, %171 : vector<8x64xf32>
    %173 = arith.addf %170, %172 : vector<8x64xf32>
    %174 = math.tanh %173 : vector<8x64xf32>
    %cst_39 = arith.constant 1.000000e+00 : f32
    %175 = vector.broadcast %cst_39 : f32 to vector<8x64xf32>
    %176 = arith.subf %175, %169 : vector<8x64xf32>
    %177 = arith.mulf %176, %174 : vector<8x64xf32>
    %178 = arith.mulf %169, %155 : vector<8x64xf32>
    %179 = arith.addf %177, %178 : vector<8x64xf32>
    %c56 = arith.constant 56 : index
    %c0_40 = arith.constant 0 : index
    %180 = vector.load %arg5[%c56, %c0_40] : memref<64x192xf32, #tpu.memory_space<vmem>>, vector<8x192xf32>
    %181 = arith.truncf %179 : vector<8x64xf32> to vector<8x64xbf16>
    %cst_41 = arith.constant dense<0.000000e+00> : vector<8x192xf32>
    %182 = tpu.matmul %181, %7, %cst_41 {dimension_numbers = #tpu.dot_dimension_numbers<[1], [0], [0], [1], [0, 0, 1, 1], [], []>} : vector<8x64xbf16>, vector<64x192xbf16>, vector<8x192xf32> -> vector<8x192xf32>
    %183 = vector.extract_strided_slice %182 {offsets = [0, 0], sizes = [8, 128], strides = [1, 1]} : vector<8x192xf32> to vector<8x128xf32>
    %184 = vector.extract_strided_slice %182 {offsets = [0, 128], sizes = [8, 64], strides = [1, 1]} : vector<8x192xf32> to vector<8x64xf32>
    %185 = vector.extract_strided_slice %180 {offsets = [0, 0], sizes = [8, 128], strides = [1, 1]} : vector<8x192xf32> to vector<8x128xf32>
    %186 = arith.addf %185, %183 : vector<8x128xf32>
    %187 = arith.negf %186 : vector<8x128xf32>
    %188 = math.exp %187 : vector<8x128xf32>
    %cst_42 = arith.constant 1.000000e+00 : f32
    %189 = vector.broadcast %cst_42 : f32 to vector<8x128xf32>
    %190 = arith.addf %189, %188 : vector<8x128xf32>
    %191 = arith.divf %189, %190 : vector<8x128xf32>
    %192 = vector.extract_strided_slice %191 {offsets = [0, 0], sizes = [8, 64], strides = [1, 1]} : vector<8x128xf32> to vector<8x64xf32>
    %193 = vector.extract_strided_slice %191 {offsets = [0, 64], sizes = [8, 64], strides = [1, 1]} : vector<8x128xf32> to vector<8x64xf32>
    %194 = vector.extract_strided_slice %180 {offsets = [0, 128], sizes = [8, 64], strides = [1, 1]} : vector<8x192xf32> to vector<8x64xf32>
    %195 = arith.addf %184, %10 : vector<8x64xf32>
    %196 = arith.mulf %192, %195 : vector<8x64xf32>
    %197 = arith.addf %194, %196 : vector<8x64xf32>
    %198 = math.tanh %197 : vector<8x64xf32>
    %cst_43 = arith.constant 1.000000e+00 : f32
    %199 = vector.broadcast %cst_43 : f32 to vector<8x64xf32>
    %200 = arith.subf %199, %193 : vector<8x64xf32>
    %201 = arith.mulf %200, %198 : vector<8x64xf32>
    %202 = arith.mulf %193, %179 : vector<8x64xf32>
    %203 = arith.addf %201, %202 : vector<8x64xf32>
    %c72 = arith.constant 72 : index
    %c0_44 = arith.constant 0 : index
    %204 = vector.load %arg2[%c72, %c0_44] : memref<136x192xbf16, #tpu.memory_space<vmem>>, vector<64x32xbf16>
    %205 = arith.truncf %203 : vector<8x64xf32> to vector<8x64xbf16>
    %cst_45 = arith.constant dense<0.000000e+00> : vector<8x32xf32>
    %206 = tpu.matmul %205, %204, %cst_45 {dimension_numbers = #tpu.dot_dimension_numbers<[1], [0], [0], [1], [0, 0, 1, 1], [], []>} : vector<8x64xbf16>, vector<64x32xbf16>, vector<8x32xf32> -> vector<8x32xf32>
    %c0_46 = arith.constant 0 : index
    %c0_47 = arith.constant 0 : index
    %207 = vector.load %arg1[%c0_46, %c0_47] : memref<8x1xf32, #tpu.memory_space<vmem>>, vector<8x1xf32>
    %c2 = arith.constant 2 : index
    %c0_48 = arith.constant 0 : index
    %208 = vector.load %arg3[%c2, %c0_48] : memref<8x192xf32, #tpu.memory_space<vmem>>, vector<1x32xf32>
    %209 = vector.broadcast %207 : vector<8x1xf32> to vector<8x32xf32>
    %210 = vector.broadcast %208 : vector<1x32xf32> to vector<8x32xf32>
    %211 = arith.mulf %209, %210 : vector<8x32xf32>
    %212 = arith.addf %206, %211 : vector<8x32xf32>
    %c3 = arith.constant 3 : index
    %c0_49 = arith.constant 0 : index
    %213 = vector.load %arg3[%c3, %c0_49] : memref<8x192xf32, #tpu.memory_space<vmem>>, vector<1x32xf32>
    %214 = vector.broadcast %213 : vector<1x32xf32> to vector<8x32xf32>
    %215 = arith.addf %212, %214 : vector<8x32xf32>
    %cst_50 = arith.constant 0.000000e+00 : f32
    %216 = vector.broadcast %cst_50 : f32 to vector<8x32xf32>
    %217 = arith.maximumf %215, %216 : vector<8x32xf32>
    %c4 = arith.constant 4 : index
    %c0_51 = arith.constant 0 : index
    %218 = vector.load %arg3[%c4, %c0_51] : memref<8x192xf32, #tpu.memory_space<vmem>>, vector<1x32xf32>
    %219 = vector.broadcast %218 : vector<1x32xf32> to vector<8x32xf32>
    %220 = arith.mulf %217, %219 : vector<8x32xf32>
    %cst_52 = arith.constant dense<0.000000e+00> : vector<8xf32>
    %221 = vector.multi_reduction <add>, %220, %cst_52 [1] : vector<8x32xf32> to vector<8xf32>
    %222 = vector.shape_cast %221 : vector<8xf32> to vector<8x1xf32>
    %c5 = arith.constant 5 : index
    %c0_53 = arith.constant 0 : index
    %223 = vector.load %arg3[%c5, %c0_53] : memref<8x192xf32, #tpu.memory_space<vmem>>, vector<1x1xf32>
    %224 = vector.broadcast %223 : vector<1x1xf32> to vector<8x1xf32>
    %225 = arith.addf %222, %224 : vector<8x1xf32>
    %c0_54 = arith.constant 0 : index
    %c0_55 = arith.constant 0 : index
    %226 = vector.load %arg4[%c0_54, %c0_55] : memref<8x1xf32, #tpu.memory_space<vmem>>, vector<8x1xf32>
    tpu.vector_store %arg4[%c0_54, %c0_55], %225 {strides = array<i32>} : memref<8x1xf32, #tpu.memory_space<vmem>>, vector<8x1xf32>,
    return
  }
}

</mosaic_0001>

<llo_original>
// kernel: gru_forward.1
$region0: #{gru_forward.1}
  #allocation0 [shape = 'u32[]', space=smem, size = 0x4, offset = 0x4, fixed_abs, tag = 'smem constant byte address 0x4 - core index']
  #allocation1 [shape = 'u32[144,128]{1,0:T(1,128)}', space=vmem, size = 0x12000, scoped, tag = 'internal scratch']
  #allocation2 [shape = 'f32[64,192]{1,0:T(8,128)}', space=vmem, size = 0x10000, scoped, tag = 'scratch operand']
  %s0 = inlined_call_operand.vmem [shape: bf16[64,8], index: 0, kind: input, shape index: {}]
  %s1 = inlined_call_operand.vmem [shape: f32[8,1], index: 1, kind: input, shape index: {}]
  %s2 = inlined_call_operand.hbm [shape: bf16[136,192], index: 2, kind: input, shape index: {}]
  %s3 = inlined_call_operand.vmem [shape: f32[8,192], index: 3, kind: input, shape index: {}]
  %s4 = inlined_call_operand.vmem [shape: f32[8,1], index: 4, kind: output, shape index: {}]
  %s5 = sld [smem:[#allocation0]]
  $region30: #{gru_forward.1} parent=0
    _
  %s7 = ssub.s32 1, %s5
  %s8 = scalar_select 0, %s7, %s5
  $region1: #{gru_forward.1} parent=0
    #allocation3 [shape = 'u8[69632]{0}', space=vmem, size = 0x11000, scoped, tag = 'input window, operand 2, single buffered']
    #allocation4 [shape = 's32[1]{0}', space=sflag, size = 0x4, scoped, tag = 'scoped memory for gru_forward.1']
    %9 = vsyncpa [#allocation4], 0
    // Predicated region
    $region2: #{gru_forward.1} parent=1 // pred_check
      _
    $region3: #{gru_forward.1} parent=1 // pred_check_branch
      %11 = sbr.rel (0) target = $region5
    $region4: #{gru_forward.1} parent=1 // pred_region
      _
    $region5: #{gru_forward.1} parent=1 // pred_fallthru
      _
    // Predicated region
    $region6: #{gru_forward.1} parent=1 // pred_check
      _
    $region7: #{gru_forward.1} parent=1 // pred_check_branch
      %13 = sbr.rel (0) target = $region9
    $region8: #{gru_forward.1} parent=1 // pred_region
      _
    $region9: #{gru_forward.1} parent=1 // pred_fallthru
      _
    // Predicated region
    $region10: #{gru_forward.1} parent=1 // pred_check
      _
    $region11: #{gru_forward.1} parent=1 // pred_check_branch
      %15 = sbr.rel (0) target = $region13
    $region12: #{gru_forward.1} parent=1 // pred_region
      %s17 = ssub.s32 2176, 2176
      %18 = vsyncadd [#allocation4], %s17
      %s19 = sshll.u32 [#allocation3], 4
      %s20 = int_to_ptr.vmem [resolvable:$true] %s19
      %25 = dma.hbm_to_vmem [thread:$0]  %s2, 2176, %s20, [#allocation4], 128, 128, 8
    $region13: #{gru_forward.1} parent=1 // pred_fallthru
      _
    // Predicated region
    $region14: #{gru_forward.1} parent=1 // pred_check
      _
    $region15: #{gru_forward.1} parent=1 // pred_check_branch
      %27 = sbr.rel (0) target = $region17
    $region16: #{gru_forward.1} parent=1 // pred_region
      _
    $region17: #{gru_forward.1} parent=1 // pred_fallthru
      _
    // Predicated region
    $region18: #{gru_forward.1} parent=1 // pred_check
      _
    $region19: #{gru_forward.1} parent=1 // pred_check_branch
      %29 = sbr.rel (0) target = $region21
    $region20: #{gru_forward.1} parent=1 // pred_region
      %30 = dma.done [#allocation4], 2176
    $region21: #{gru_forward.1} parent=1 // pred_fallthru
      _
    %v32 = vld [vmem:[%s0] sm:$0xf]
    %v33 = vld [vmem:[%s0 + $0x4] sm:$0xf]
    %v34 = vld [vmem:[%s0 + $0x8] sm:$0xf]
    %v35 = vld [vmem:[%s0 + $0xc] sm:$0xf]
    %v36 = vld [vmem:[%s0 + $0x10] sm:$0xf]
    %v37 = vld [vmem:[%s0 + $0x14] sm:$0xf]
    %v38 = vld [vmem:[%s0 + $0x18] sm:$0xf]
    %v39 = vld [vmem:[%s0 + $0x1c] sm:$0xf]
    %v40 = vld [vmem:[#allocation3] sm:$0xff]
    %v41 = vld [vmem:[%s3] ss:$8 sm:$0x3]
    %v43 = vlaneseq
    %v44 = vshrl.u32 %v43, 7
    %v45 = vsub.s32 0, %v44
    %v46 = vrot.slane %v41, %v45
    %v47 = vlaneseq
    %v48 = vshrl.u32 %v47, 7
    %v49 = vsub.s32 1, %v48
    %v50 = vrot.slane %v41, %v49
    %v61 = vunpack.c.l.b16 %v32
    %v62 = vunpack.c.l.b16 %v33
    %v63 = vunpack.c.l.b16 %v34
    %v64 = vunpack.c.l.b16 %v35
    %v65 = vunpack.c.l.b16 %v36
    %v66 = vunpack.c.l.b16 %v37
    %v67 = vunpack.c.l.b16 %v38
    %v68 = vunpack.c.l.b16 %v39
    %v69 = vpack.c.b16 %v62, %v61
    %v70 = vpack.c.b16 %v64, %v63
    %v71 = vpack.c.b16 %v66, %v65
    %v72 = vpack.c.b16 %v68, %v67
    %v74 = vunpack.c.l.b16 %v40
    %v75 = vunpack.c.h.b16 %v40
    %v76 = vpack.c.b16 %v74, %v74
    %v77 = vpack.c.b16 %v75, %v75
    %vm78 = vcmask 64512
    %v80 = vsel %vm78, %v69, 0
    %v83 = vsel %vm78, %v70, 0
    %v86 = vsel %vm78, %v71, 0
    %v89 = vsel %vm78, %v72, 0
    %vm91 = vcmask 1043456
    %v93 = vsel %vm91, %v76, 0
    %v96 = vsel %vm91, %v77, 0
    %98 = vmatprep.subr.bf16.mxu0 0
    %99 = vmatpush1.bf16.msra.mxu0 0
    %100 = vmatprep.subr.bf16.mxu0 0
    %101 = vmatpush1.bf16.msra.mxu0 0
    %102 = vmatprep.subr.bf16.mxu0 0
    %103 = vmatpush1.bf16.msra.mxu0 0
    %104 = vmatprep.subr.bf16.mxu0 0
    %105 = vmatpush1.bf16.msra.mxu0 0
    %106 = vmatprep.subr.bf16.mxu0 0
    %107 = vmatpush1.bf16.msra.mxu0 0
    %108 = vmatprep.subr.bf16.mxu0 0
    %109 = vmatpush1.bf16.msra.mxu0 0
    %110 = vmatprep.subr.bf16.mxu0 0
    %111 = vmatpush1.bf16.msra.mxu0 0
    %112 = vmatprep.subr.bf16.mxu0 %v96
    %113 = vmatpush1.bf16.msra.mxu0 %v93
    %114 = vmatprep.subr.bf16.mxu0 0
    %115 = vmatpush2.bf16.msra.mxu0 0
    %116 = vmatprep.subr.bf16.mxu0 0
    %117 = vmatpush2.bf16.msra.mxu0 0
    %118 = vmatprep.subr.bf16.mxu0 0
    %119 = vmatpush2.bf16.msra.mxu0 0
    %120 = vmatprep.subr.bf16.mxu0 0
    %121 = vmatpush2.bf16.msra.mxu0 0
    %122 = vmatprep.subr.bf16.mxu0 0
    %123 = vmatpush2.bf16.msra.mxu0 0
    %124 = vmatprep.subr.bf16.mxu0 0
    %125 = vmatpush2.bf16.msra.mxu0 0
    %126 = vmatprep.subr.bf16.mxu0 0
    %127 = vmatpush2.bf16.msra.mxu0 0
    %128 = vmatprep.subr.bf16.mxu0 0
    %129 = vmatpush2.bf16.msra.mxu0 0
    %130 = vmatprep.mubr.bf16.mxu0 0
    %131 = vmatmul.mubr.bf16.gmra.mxu0 %v80
    %v132 = vpop.f32.mrf.mxu0
    %v133 = vadd.f32 %v46, %v132
    %v134 = vpop.f32.mrf.mxu0
    %v135 = vadd.f32 %v50, %v134
    %v136 = vpop.f32.mrf.mxu0
    %v137 = vadd.f32 %v46, %v136
    %v138 = vpop.f32.mrf.mxu0
    %v139 = vadd.f32 %v50, %v138
    %140 = vmatprep.mubr.bf16.mxu0 0
    %141 = vmatmul.mubr.bf16.gmra.mxu0 %v83
    %v142 = vpop.f32.mrf.mxu0
    %v143 = vadd.f32 %v46, %v142
    %v144 = vpop.f32.mrf.mxu0
    %v145 = vadd.f32 %v50, %v144
    %v146 = vpop.f32.mrf.mxu0
    %v147 = vadd.f32 %v46, %v146
    %v148 = vpop.f32.mrf.mxu0
    %v149 = vadd.f32 %v50, %v148
    %150 = vmatprep.mubr.bf16.mxu0 0
    %151 = vmatmul.mubr.bf16.gmra.mxu0 %v86
    %v152 = vpop.f32.mrf.mxu0
    %v153 = vadd.f32 %v46, %v152
    %v154 = vpop.f32.mrf.mxu0
    %v155 = vadd.f32 %v50, %v154
    %v156 = vpop.f32.mrf.mxu0
    %v157 = vadd.f32 %v46, %v156
    %v158 = vpop.f32.mrf.mxu0
    %v159 = vadd.f32 %v50, %v158
    %160 = vmatprep.mubr.bf16.mxu0 0
    %161 = vmatmul.mubr.bf16.gmra.mxu0 %v89
    %v162 = vpop.f32.mrf.mxu0
    %v163 = vadd.f32 %v46, %v162
    %v164 = vpop.f32.mrf.mxu0
    %v165 = vadd.f32 %v50, %v164
    %v166 = vpop.f32.mrf.mxu0
    %v167 = vadd.f32 %v46, %v166
    %v168 = vpop.f32.mrf.mxu0
    %v169 = vadd.f32 %v50, %v168
    %170 = vdwg.mxu0
    %171 = vst [vmem:[#allocation2] sm:$0xff] %v133
    %vm172 = vcmask 523264
    %173 = vst.msk [vmem:[#allocation2 + $0x8] sm:$0xff] %vm172, %v135
    %174 = vst [vmem:[#allocation2 + $0x10] sm:$0xff] %v137
    %175 = vst.msk [vmem:[#allocation2 + $0x18] sm:$0xff] %vm172, %v139
    %176 = vst [vmem:[#allocation2 + $0x20] sm:$0xff] %v143
    %177 = vst.msk [vmem:[#allocation2 + $0x28] sm:$0xff] %vm172, %v145
    %178 = vst [vmem:[#allocation2 + $0x30] sm:$0xff] %v147
    %179 = vst.msk [vmem:[#allocation2 + $0x38] sm:$0xff] %vm172, %v149
    %180 = vst [vmem:[#allocation2 + $0x40] sm:$0xff] %v153
    %181 = vst.msk [vmem:[#allocation2 + $0x48] sm:$0xff] %vm172, %v155
    %182 = vst [vmem:[#allocation2 + $0x50] sm:$0xff] %v157
    %183 = vst.msk [vmem:[#allocation2 + $0x58] sm:$0xff] %vm172, %v159
    %184 = vst [vmem:[#allocation2 + $0x60] sm:$0xff] %v163
    %185 = vst.msk [vmem:[#allocation2 + $0x68] sm:$0xff] %vm172, %v165
    %186 = vst [vmem:[#allocation2 + $0x70] sm:$0xff] %v167
    %187 = vst.msk [vmem:[#allocation2 + $0x78] sm:$0xff] %vm172, %v169
    %v188 = vld [vmem:[#allocation3 + $0x8] sm:$0xff]
    %v189 = vld [vmem:[#allocation3 + $0x10] sm:$0xff]
    %v190 = vld [vmem:[#allocation3 + $0x18] sm:$0xff]
    %v191 = vld [vmem:[#allocation3 + $0x20] sm:$0xff]
    %v192 = vld [vmem:[#allocation3 + $0x28] sm:$0xff]
    %v193 = vld [vmem:[#allocation3 + $0x30] sm:$0xff]
    %v194 = vld [vmem:[#allocation3 + $0x38] sm:$0xff]
    %v195 = vld [vmem:[#allocation3 + $0x40] sm:$0xff]
    %v196 = vld [vmem:[%s3 + $0x1] ss:$0 sm:$0xff]
    %v197 = vld [vmem:[#allocation2] sm:$0xff]
    %v198 = vld [vmem:[#allocation2 + $0x8] sm:$0xff]
    %v207 = vunpack.c.l.b16 %v188
    %v208 = vunpack.c.h.b16 %v188
    %v209 = vunpack.c.l.b16 %v189
    %v210 = vunpack.c.h.b16 %v189
    %v211 = vunpack.c.l.b16 %v190
    %v212 = vunpack.c.h.b16 %v190
    %v213 = vunpack.c.l.b16 %v191
    %v214 = vunpack.c.h.b16 %v191
    %v215 = vunpack.c.l.b16 %v192
    %v216 = vunpack.c.h.b16 %v192
    %v217 = vunpack.c.l.b16 %v193
    %v218 = vunpack.c.h.b16 %v193
    %v219 = vunpack.c.l.b16 %v194
    %v220 = vunpack.c.h.b16 %v194
    %v221 = vunpack.c.l.b16 %v195
    %v222 = vunpack.c.h.b16 %v195
    %v223 = vpack.c.b16 %v209, %v207
    %v224 = vpack.c.b16 %v210, %v208
    %v225 = vpack.c.b16 %v213, %v211
    %v226 = vpack.c.b16 %v214, %v212
    %v227 = vpack.c.b16 %v217, %v215
    %v228 = vpack.c.b16 %v218, %v216
    %v229 = vpack.c.b16 %v221, %v219
    %v230 = vpack.c.b16 %v222, %v220
    %v240 = vsel %vm172, 0, 0
    %242 = vmatprep.subr.bf16.mxu0 0
    %243 = vmatpush1.bf16.msra.mxu0 0
    %244 = vmatprep.subr.bf16.mxu0 0
    %245 = vmatpush1.bf16.msra.mxu0 0
    %246 = vmatprep.subr.bf16.mxu0 0
    %247 = vmatpush1.bf16.msra.mxu0 0
    %248 = vmatprep.subr.bf16.mxu0 0
    %249 = vmatpush1.bf16.msra.mxu0 0
    %250 = vmatprep.subr.bf16.mxu0 %v230
    %251 = vmatpush1.bf16.msra.mxu0 %v229
    %252 = vmatprep.subr.bf16.mxu0 %v228
    %253 = vmatpush1.bf16.msra.mxu0 %v227
    %254 = vmatprep.subr.bf16.mxu0 %v226
    %255 = vmatpush1.bf16.msra.mxu0 %v225
    %256 = vmatprep.subr.bf16.mxu0 %v224
    %257 = vmatpush1.bf16.msra.mxu0 %v223
    %258 = vmatprep.subr.bf16.mxu0 0
    %259 = vmatpush2.bf16.msra.mxu0 0
    %260 = vmatprep.subr.bf16.mxu0 0
    %261 = vmatpush2.bf16.msra.mxu0 0
    %262 = vmatprep.subr.bf16.mxu0 0
    %263 = vmatpush2.bf16.msra.mxu0 0
    %264 = vmatprep.subr.bf16.mxu0 0
    %265 = vmatpush2.bf16.msra.mxu0 0
    %266 = vmatprep.subr.bf16.mxu0 0
    %267 = vmatpush2.bf16.msra.mxu0 0
    %268 = vmatprep.subr.bf16.mxu0 0
    %269 = vmatpush2.bf16.msra.mxu0 0
    %270 = vmatprep.subr.bf16.mxu0 0
    %271 = vmatpush2.bf16.msra.mxu0 0
    %272 = vmatprep.subr.bf16.mxu0 0
    %273 = vmatpush2.bf16.msra.mxu0 0
    %274 = vmatprep.mubr.bf16.mxu0 0
    %275 = vmatmul.mubr.bf16.gmra.mxu0 %v240
    %v276 = vpop.f32.mrf.mxu0
    %v277 = vadd.f32 0.0, %v276
    %v278 = vpop.f32.mrf.mxu0
    %v279 = vadd.f32 0.0, %v278
    %v280 = vpop.f32.mrf.mxu0
    %v281 = vpop.f32.mrf.mxu0
    %282 = vdwg.mxu0
    %v283 = vadd.f32 %v197, %v277
    %v284 = vxor.u32 %v283, 2147483648
    %v285 = vmul.f32 %v284, 1.442695
    %v286 = vpow.pop %v285
    %v287 = vadd.f32 %v286, 1.0
    %v288 = vrcp.pop %v287
    %v289 = vmul.f32 1.0, %v288
    %v290 = vadd.f32 %v279, %v196
    %v291 = vmul.f32 %v289, %v290
    %v292 = vadd.f32 %v198, %v291
    %v293 = vtanh.pop %v292
    %v294 = vsub.f32 1.0, %v289
    %296 = vrot.lane.b32.xlu0 %v293, 64
    %v297 = vpop.permute.xlu0 %296
    %v299 = vmul.f32 %v294, %v297
    %v300 = vmul.f32 %v289, 0.0
    %v301 = vadd.f32 %v299, %v300
    %v302 = vld [vmem:[#allocation2 + $0x10] sm:$0xff]
    %v303 = vld [vmem:[#allocation2 + $0x18] sm:$0xff]
    %v304 = vpack.c.bf16 %v301, %v301
    %306 = vrot.lane.b32.xlu0 %v304, 64
    %v307 = vpop.permute.xlu0 %306
    %v309 = vsel %vm172, %v307, 0
    %311 = vmatprep.subr.bf16.mxu0 0
    %312 = vmatpush1.bf16.msra.mxu0 0
    %313 = vmatprep.subr.bf16.mxu0 0
    %314 = vmatpush1.bf16.msra.mxu0 0
    %315 = vmatprep.subr.bf16.mxu0 0
    %316 = vmatpush1.bf16.msra.mxu0 0
    %317 = vmatprep.subr.bf16.mxu0 0
    %318 = vmatpush1.bf16.msra.mxu0 0
    %319 = vmatprep.subr.bf16.mxu0 %v230
    %320 = vmatpush1.bf16.msra.mxu0 %v229
    %321 = vmatprep.subr.bf16.mxu0 %v228
    %322 = vmatpush1.bf16.msra.mxu0 %v227
    %323 = vmatprep.subr.bf16.mxu0 %v226
    %324 = vmatpush1.bf16.msra.mxu0 %v225
    %325 = vmatprep.subr.bf16.mxu0 %v224
    %326 = vmatpush1.bf16.msra.mxu0 %v223
    %327 = vmatprep.subr.bf16.mxu0 0
    %328 = vmatpush2.bf16.msra.mxu0 0
    %329 = vmatprep.subr.bf16.mxu0 0
    %330 = vmatpush2.bf16.msra.mxu0 0
    %331 = vmatprep.subr.bf16.mxu0 0
    %332 = vmatpush2.bf16.msra.mxu0 0
    %333 = vmatprep.subr.bf16.mxu0 0
    %334 = vmatpush2.bf16.msra.mxu0 0
    %335 = vmatprep.subr.bf16.mxu0 0
    %336 = vmatpush2.bf16.msra.mxu0 0
    %337 = vmatprep.subr.bf16.mxu0 0
    %338 = vmatpush2.bf16.msra.mxu0 0
    %339 = vmatprep.subr.bf16.mxu0 0
    %340 = vmatpush2.bf16.msra.mxu0 0
    %341 = vmatprep.subr.bf16.mxu0 0
    %342 = vmatpush2.bf16.msra.mxu0 0
    %343 = vmatprep.mubr.bf16.mxu0 0
    %344 = vmatmul.mubr.bf16.gmra.mxu0 %v309
    %v345 = vpop.f32.mrf.mxu0
    %v346 = vadd.f32 0.0, %v345
    %v347 = vpop.f32.mrf.mxu0
    %v348 = vadd.f32 0.0, %v347
    %v349 = vpop.f32.mrf.mxu0
    %v350 = vpop.f32.mrf.mxu0
    %351 = vdwg.mxu0
    %v352 = vadd.f32 %v302, %v346
    %v353 = vxor.u32 %v352, 2147483648
    %v354 = vmul.f32 %v353, 1.442695
    %v355 = vpow.pop %v354
    %v356 = vadd.f32 %v355, 1.0
    %v357 = vrcp.pop %v356
    %v358 = vmul.f32 1.0, %v357
    %v359 = vadd.f32 %v348, %v196
    %v360 = vmul.f32 %v358, %v359
    %v361 = vadd.f32 %v303, %v360
    %v362 = vtanh.pop %v361
    %v363 = vsub.f32 1.0, %v358
    %365 = vrot.lane.b32.xlu0 %v362, 64
    %v366 = vpop.permute.xlu0 %365
    %v368 = vmul.f32 %v363, %v366
    %v369 = vmul.f32 %v358, %v301
    %v370 = vadd.f32 %v368, %v369
    %v371 = vld [vmem:[#allocation2 + $0x20] sm:$0xff]
    %v372 = vld [vmem:[#allocation2 + $0x28] sm:$0xff]
    %v373 = vpack.c.bf16 %v370, %v370
    %375 = vrot.lane.b32.xlu0 %v373, 64
    %v376 = vpop.permute.xlu0 %375
    %v378 = vsel %vm172, %v376, 0
    %380 = vmatprep.subr.bf16.mxu0 0
    %381 = vmatpush1.bf16.msra.mxu0 0
    %382 = vmatprep.subr.bf16.mxu0 0
    %383 = vmatpush1.bf16.msra.mxu0 0
    %384 = vmatprep.subr.bf16.mxu0 0
    %385 = vmatpush1.bf16.msra.mxu0 0
    %386 = vmatprep.subr.bf16.mxu0 0
    %387 = vmatpush1.bf16.msra.mxu0 0
    %388 = vmatprep.subr.bf16.mxu0 %v230
    %389 = vmatpush1.bf16.msra.mxu0 %v229
    %390 = vmatprep.subr.bf16.mxu0 %v228
    %391 = vmatpush1.bf16.msra.mxu0 %v227
    %392 = vmatprep.subr.bf16.mxu0 %v226
    %393 = vmatpush1.bf16.msra.mxu0 %v225
    %394 = vmatprep.subr.bf16.mxu0 %v224
    %395 = vmatpush1.bf16.msra.mxu0 %v223
    %396 = vmatprep.subr.bf16.mxu0 0
    %397 = vmatpush2.bf16.msra.mxu0 0
    %398 = vmatprep.subr.bf16.mxu0 0
    %399 = vmatpush2.bf16.msra.mxu0 0
    %400 = vmatprep.subr.bf16.mxu0 0
    %401 = vmatpush2.bf16.msra.mxu0 0
    %402 = vmatprep.subr.bf16.mxu0 0
    %403 = vmatpush2.bf16.msra.mxu0 0
    %404 = vmatprep.subr.bf16.mxu0 0
    %405 = vmatpush2.bf16.msra.mxu0 0
    %406 = vmatprep.subr.bf16.mxu0 0
    %407 = vmatpush2.bf16.msra.mxu0 0
    %408 = vmatprep.subr.bf16.mxu0 0
    %409 = vmatpush2.bf16.msra.mxu0 0
    %410 = vmatprep.subr.bf16.mxu0 0
    %411 = vmatpush2.bf16.msra.mxu0 0
    %412 = vmatprep.mubr.bf16.mxu0 0
    %413 = vmatmul.mubr.bf16.gmra.mxu0 %v378
    %v414 = vpop.f32.mrf.mxu0
    %v415 = vadd.f32 0.0, %v414
    %v416 = vpop.f32.mrf.mxu0
    %v417 = vadd.f32 0.0, %v416
    %v418 = vpop.f32.mrf.mxu0
    %v419 = vpop.f32.mrf.mxu0
    %420 = vdwg.mxu0
    %v421 = vadd.f32 %v371, %v415
    %v422 = vxor.u32 %v421, 2147483648
    %v423 = vmul.f32 %v422, 1.442695
    %v424 = vpow.pop %v423
    %v425 = vadd.f32 %v424, 1.0
    %v426 = vrcp.pop %v425
    %v427 = vmul.f32 1.0, %v426
    %v428 = vadd.f32 %v417, %v196
    %v429 = vmul.f32 %v427, %v428
    %v430 = vadd.f32 %v372, %v429
    %v431 = vtanh.pop %v430
    %v432 = vsub.f32 1.0, %v427
    %434 = vrot.lane.b32.xlu0 %v431, 64
    %v435 = vpop.permute.xlu0 %434
    %v437 = vmul.f32 %v432, %v435
    %v438 = vmul.f32 %v427, %v370
    %v439 = vadd.f32 %v437, %v438
    %v440 = vld [vmem:[#allocation2 + $0x30] sm:$0xff]
    %v441 = vld [vmem:[#allocation2 + $0x38] sm:$0xff]
    %v442 = vpack.c.bf16 %v439, %v439
    %444 = vrot.lane.b32.xlu0 %v442, 64
    %v445 = vpop.permute.xlu0 %444
    %v447 = vsel %vm172, %v445, 0
    %449 = vmatprep.subr.bf16.mxu0 0
    %450 = vmatpush1.bf16.msra.mxu0 0
    %451 = vmatprep.subr.bf16.mxu0 0
    %452 = vmatpush1.bf16.msra.mxu0 0
    %453 = vmatprep.subr.bf16.mxu0 0
    %454 = vmatpush1.bf16.msra.mxu0 0
    %455 = vmatprep.subr.bf16.mxu0 0
    %456 = vmatpush1.bf16.msra.mxu0 0
    %457 = vmatprep.subr.bf16.mxu0 %v230
    %458 = vmatpush1.bf16.msra.mxu0 %v229
    %459 = vmatprep.subr.bf16.mxu0 %v228
    %460 = vmatpush1.bf16.msra.mxu0 %v227
    %461 = vmatprep.subr.bf16.mxu0 %v226
    %462 = vmatpush1.bf16.msra.mxu0 %v225
    %463 = vmatprep.subr.bf16.mxu0 %v224
    %464 = vmatpush1.bf16.msra.mxu0 %v223
    %465 = vmatprep.subr.bf16.mxu0 0
    %466 = vmatpush2.bf16.msra.mxu0 0
    %467 = vmatprep.subr.bf16.mxu0 0
    %468 = vmatpush2.bf16.msra.mxu0 0
    %469 = vmatprep.subr.bf16.mxu0 0
    %470 = vmatpush2.bf16.msra.mxu0 0
    %471 = vmatprep.subr.bf16.mxu0 0
    %472 = vmatpush2.bf16.msra.mxu0 0
    %473 = vmatprep.subr.bf16.mxu0 0
    %474 = vmatpush2.bf16.msra.mxu0 0
    %475 = vmatprep.subr.bf16.mxu0 0
    %476 = vmatpush2.bf16.msra.mxu0 0
    %477 = vmatprep.subr.bf16.mxu0 0
    %478 = vmatpush2.bf16.msra.mxu0 0
    %479 = vmatprep.subr.bf16.mxu0 0
    %480 = vmatpush2.bf16.msra.mxu0 0
    %481 = vmatprep.mubr.bf16.mxu0 0
    %482 = vmatmul.mubr.bf16.gmra.mxu0 %v447
    %v483 = vpop.f32.mrf.mxu0
    %v484 = vadd.f32 0.0, %v483
    %v485 = vpop.f32.mrf.mxu0
    %v486 = vadd.f32 0.0, %v485
    %v487 = vpop.f32.mrf.mxu0
    %v488 = vpop.f32.mrf.mxu0
    %489 = vdwg.mxu0
    %v490 = vadd.f32 %v440, %v484
    %v491 = vxor.u32 %v490, 2147483648
    %v492 = vmul.f32 %v491, 1.442695
    %v493 = vpow.pop %v492
    %v494 = vadd.f32 %v493, 1.0
    %v495 = vrcp.pop %v494
    %v496 = vmul.f32 1.0, %v495
    %v497 = vadd.f32 %v486, %v196
    %v498 = vmul.f32 %v496, %v497
    %v499 = vadd.f32 %v441, %v498
    %v500 = vtanh.pop %v499
    %v501 = vsub.f32 1.0, %v496
    %503 = vrot.lane.b32.xlu0 %v500, 64
    %v504 = vpop.permute.xlu0 %503
    %v506 = vmul.f32 %v501, %v504
    %v507 = vmul.f32 %v496, %v439
    %v508 = vadd.f32 %v506, %v507
    %v509 = vld [vmem:[#allocation2 + $0x40] sm:$0xff]
    %v510 = vld [vmem:[#allocation2 + $0x48] sm:$0xff]
    %v511 = vpack.c.bf16 %v508, %v508
    %513 = vrot.lane.b32.xlu0 %v511, 64
    %v514 = vpop.permute.xlu0 %513
    %v516 = vsel %vm172, %v514, 0
    %518 = vmatprep.subr.bf16.mxu0 0
    %519 = vmatpush1.bf16.msra.mxu0 0
    %520 = vmatprep.subr.bf16.mxu0 0
    %521 = vmatpush1.bf16.msra.mxu0 0
    %522 = vmatprep.subr.bf16.mxu0 0
    %523 = vmatpush1.bf16.msra.mxu0 0
    %524 = vmatprep.subr.bf16.mxu0 0
    %525 = vmatpush1.bf16.msra.mxu0 0
    %526 = vmatprep.subr.bf16.mxu0 %v230
    %527 = vmatpush1.bf16.msra.mxu0 %v229
    %528 = vmatprep.subr.bf16.mxu0 %v228
    %529 = vmatpush1.bf16.msra.mxu0 %v227
    %530 = vmatprep.subr.bf16.mxu0 %v226
    %531 = vmatpush1.bf16.msra.mxu0 %v225
    %532 = vmatprep.subr.bf16.mxu0 %v224
    %533 = vmatpush1.bf16.msra.mxu0 %v223
    %534 = vmatprep.subr.bf16.mxu0 0
    %535 = vmatpush2.bf16.msra.mxu0 0
    %536 = vmatprep.subr.bf16.mxu0 0
    %537 = vmatpush2.bf16.msra.mxu0 0
    %538 = vmatprep.subr.bf16.mxu0 0
    %539 = vmatpush2.bf16.msra.mxu0 0
    %540 = vmatprep.subr.bf16.mxu0 0
    %541 = vmatpush2.bf16.msra.mxu0 0
    %542 = vmatprep.subr.bf16.mxu0 0
    %543 = vmatpush2.bf16.msra.mxu0 0
    %544 = vmatprep.subr.bf16.mxu0 0
    %545 = vmatpush2.bf16.msra.mxu0 0
    %546 = vmatprep.subr.bf16.mxu0 0
    %547 = vmatpush2.bf16.msra.mxu0 0
    %548 = vmatprep.subr.bf16.mxu0 0
    %549 = vmatpush2.bf16.msra.mxu0 0
    %550 = vmatprep.mubr.bf16.mxu0 0
    %551 = vmatmul.mubr.bf16.gmra.mxu0 %v516
    %v552 = vpop.f32.mrf.mxu0
    %v553 = vadd.f32 0.0, %v552
    %v554 = vpop.f32.mrf.mxu0
    %v555 = vadd.f32 0.0, %v554
    %v556 = vpop.f32.mrf.mxu0
    %v557 = vpop.f32.mrf.mxu0
    %558 = vdwg.mxu0
    %v559 = vadd.f32 %v509, %v553
    %v560 = vxor.u32 %v559, 2147483648
    %v561 = vmul.f32 %v560, 1.442695
    %v562 = vpow.pop %v561
    %v563 = vadd.f32 %v562, 1.0
    %v564 = vrcp.pop %v563
    %v565 = vmul.f32 1.0, %v564
    %v566 = vadd.f32 %v555, %v196
    %v567 = vmul.f32 %v565, %v566
    %v568 = vadd.f32 %v510, %v567
    %v569 = vtanh.pop %v568
    %v570 = vsub.f32 1.0, %v565
    %572 = vrot.lane.b32.xlu0 %v569, 64
    %v573 = vpop.permute.xlu0 %572
    %v575 = vmul.f32 %v570, %v573
    %v576 = vmul.f32 %v565, %v508
    %v577 = vadd.f32 %v575, %v576
    %v578 = vld [vmem:[#allocation2 + $0x50] sm:$0xff]
    %v579 = vld [vmem:[#allocation2 + $0x58] sm:$0xff]
    %v580 = vpack.c.bf16 %v577, %v577
    %582 = vrot.lane.b32.xlu0 %v580, 64
    %v583 = vpop.permute.xlu0 %582
    %v585 = vsel %vm172, %v583, 0
    %587 = vmatprep.subr.bf16.mxu0 0
    %588 = vmatpush1.bf16.msra.mxu0 0
    %589 = vmatprep.subr.bf16.mxu0 0
    %590 = vmatpush1.bf16.msra.mxu0 0
    %591 = vmatprep.subr.bf16.mxu0 0
    %592 = vmatpush1.bf16.msra.mxu0 0
    %593 = vmatprep.subr.bf16.mxu0 0
    %594 = vmatpush1.bf16.msra.mxu0 0
    %595 = vmatprep.subr.bf16.mxu0 %v230
    %596 = vmatpush1.bf16.msra.mxu0 %v229
    %597 = vmatprep.subr.bf16.mxu0 %v228
    %598 = vmatpush1.bf16.msra.mxu0 %v227
    %599 = vmatprep.subr.bf16.mxu0 %v226
    %600 = vmatpush1.bf16.msra.mxu0 %v225
    %601 = vmatprep.subr.bf16.mxu0 %v224
    %602 = vmatpush1.bf16.msra.mxu0 %v223
    %603 = vmatprep.subr.bf16.mxu0 0
    %604 = vmatpush2.bf16.msra.mxu0 0
    %605 = vmatprep.subr.bf16.mxu0 0
    %606 = vmatpush2.bf16.msra.mxu0 0
    %607 = vmatprep.subr.bf16.mxu0 0
    %608 = vmatpush2.bf16.msra.mxu0 0
    %609 = vmatprep.subr.bf16.mxu0 0
    %610 = vmatpush2.bf16.msra.mxu0 0
    %611 = vmatprep.subr.bf16.mxu0 0
    %612 = vmatpush2.bf16.msra.mxu0 0
    %613 = vmatprep.subr.bf16.mxu0 0
    %614 = vmatpush2.bf16.msra.mxu0 0
    %615 = vmatprep.subr.bf16.mxu0 0
    %616 = vmatpush2.bf16.msra.mxu0 0
    %617 = vmatprep.subr.bf16.mxu0 0
    %618 = vmatpush2.bf16.msra.mxu0 0
    %619 = vmatprep.mubr.bf16.mxu0 0
    %620 = vmatmul.mubr.bf16.gmra.mxu0 %v585
    %v621 = vpop.f32.mrf.mxu0
    %v622 = vadd.f32 0.0, %v621
    %v623 = vpop.f32.mrf.mxu0
    %v624 = vadd.f32 0.0, %v623
    %v625 = vpop.f32.mrf.mxu0
    %v626 = vpop.f32.mrf.mxu0
    %627 = vdwg.mxu0
    %v628 = vadd.f32 %v578, %v622
    %v629 = vxor.u32 %v628, 2147483648
    %v630 = vmul.f32 %v629, 1.442695
    %v631 = vpow.pop %v630
    %v632 = vadd.f32 %v631, 1.0
    %v633 = vrcp.pop %v632
    %v634 = vmul.f32 1.0, %v633
    %v635 = vadd.f32 %v624, %v196
    %v636 = vmul.f32 %v634, %v635
    %v637 = vadd.f32 %v579, %v636
    %v638 = vtanh.pop %v637
    %v639 = vsub.f32 1.0, %v634
    %641 = vrot.lane.b32.xlu0 %v638, 64
    %v642 = vpop.permute.xlu0 %641
    %v644 = vmul.f32 %v639, %v642
    %v645 = vmul.f32 %v634, %v577
    %v646 = vadd.f32 %v644, %v645
    %v647 = vld [vmem:[#allocation2 + $0x60] sm:$0xff]
    %v648 = vld [vmem:[#allocation2 + $0x68] sm:$0xff]
    %v649 = vpack.c.bf16 %v646, %v646
    %651 = vrot.lane.b32.xlu0 %v649, 64
    %v652 = vpop.permute.xlu0 %651
    %v654 = vsel %vm172, %v652, 0
    %656 = vmatprep.subr.bf16.mxu0 0
    %657 = vmatpush1.bf16.msra.mxu0 0
    %658 = vmatprep.subr.bf16.mxu0 0
    %659 = vmatpush1.bf16.msra.mxu0 0
    %660 = vmatprep.subr.bf16.mxu0 0
    %661 = vmatpush1.bf16.msra.mxu0 0
    %662 = vmatprep.subr.bf16.mxu0 0
    %663 = vmatpush1.bf16.msra.mxu0 0
    %664 = vmatprep.subr.bf16.mxu0 %v230
    %665 = vmatpush1.bf16.msra.mxu0 %v229
    %666 = vmatprep.subr.bf16.mxu0 %v228
    %667 = vmatpush1.bf16.msra.mxu0 %v227
    %668 = vmatprep.subr.bf16.mxu0 %v226
    %669 = vmatpush1.bf16.msra.mxu0 %v225
    %670 = vmatprep.subr.bf16.mxu0 %v224
    %671 = vmatpush1.bf16.msra.mxu0 %v223
    %672 = vmatprep.subr.bf16.mxu0 0
    %673 = vmatpush2.bf16.msra.mxu0 0
    %674 = vmatprep.subr.bf16.mxu0 0
    %675 = vmatpush2.bf16.msra.mxu0 0
    %676 = vmatprep.subr.bf16.mxu0 0
    %677 = vmatpush2.bf16.msra.mxu0 0
    %678 = vmatprep.subr.bf16.mxu0 0
    %679 = vmatpush2.bf16.msra.mxu0 0
    %680 = vmatprep.subr.bf16.mxu0 0
    %681 = vmatpush2.bf16.msra.mxu0 0
    %682 = vmatprep.subr.bf16.mxu0 0
    %683 = vmatpush2.bf16.msra.mxu0 0
    %684 = vmatprep.subr.bf16.mxu0 0
    %685 = vmatpush2.bf16.msra.mxu0 0
    %686 = vmatprep.subr.bf16.mxu0 0
    %687 = vmatpush2.bf16.msra.mxu0 0
    %688 = vmatprep.mubr.bf16.mxu0 0
    %689 = vmatmul.mubr.bf16.gmra.mxu0 %v654
    %v690 = vpop.f32.mrf.mxu0
    %v691 = vadd.f32 0.0, %v690
    %v692 = vpop.f32.mrf.mxu0
    %v693 = vadd.f32 0.0, %v692
    %v694 = vpop.f32.mrf.mxu0
    %v695 = vpop.f32.mrf.mxu0
    %696 = vdwg.mxu0
    %v697 = vadd.f32 %v647, %v691
    %v698 = vxor.u32 %v697, 2147483648
    %v699 = vmul.f32 %v698, 1.442695
    %v700 = vpow.pop %v699
    %v701 = vadd.f32 %v700, 1.0
    %v702 = vrcp.pop %v701
    %v703 = vmul.f32 1.0, %v702
    %v704 = vadd.f32 %v693, %v196
    %v705 = vmul.f32 %v703, %v704
    %v706 = vadd.f32 %v648, %v705
    %v707 = vtanh.pop %v706
    %v708 = vsub.f32 1.0, %v703
    %710 = vrot.lane.b32.xlu0 %v707, 64
    %v711 = vpop.permute.xlu0 %710
    %v713 = vmul.f32 %v708, %v711
    %v714 = vmul.f32 %v703, %v646
    %v715 = vadd.f32 %v713, %v714
    %v716 = vld [vmem:[#allocation2 + $0x70] sm:$0xff]
    %v717 = vld [vmem:[#allocation2 + $0x78] sm:$0xff]
    %v718 = vpack.c.bf16 %v715, %v715
    %720 = vrot.lane.b32.xlu0 %v718, 64
    %v721 = vpop.permute.xlu0 %720
    %v723 = vsel %vm172, %v721, 0
    %725 = vmatprep.subr.bf16.mxu0 0
    %726 = vmatpush1.bf16.msra.mxu0 0
    %727 = vmatprep.subr.bf16.mxu0 0
    %728 = vmatpush1.bf16.msra.mxu0 0
    %729 = vmatprep.subr.bf16.mxu0 0
    %730 = vmatpush1.bf16.msra.mxu0 0
    %731 = vmatprep.subr.bf16.mxu0 0
    %732 = vmatpush1.bf16.msra.mxu0 0
    %733 = vmatprep.subr.bf16.mxu0 %v230
    %734 = vmatpush1.bf16.msra.mxu0 %v229
    %735 = vmatprep.subr.bf16.mxu0 %v228
    %736 = vmatpush1.bf16.msra.mxu0 %v227
    %737 = vmatprep.subr.bf16.mxu0 %v226
    %738 = vmatpush1.bf16.msra.mxu0 %v225
    %739 = vmatprep.subr.bf16.mxu0 %v224
    %740 = vmatpush1.bf16.msra.mxu0 %v223
    %741 = vmatprep.subr.bf16.mxu0 0
    %742 = vmatpush2.bf16.msra.mxu0 0
    %743 = vmatprep.subr.bf16.mxu0 0
    %744 = vmatpush2.bf16.msra.mxu0 0
    %745 = vmatprep.subr.bf16.mxu0 0
    %746 = vmatpush2.bf16.msra.mxu0 0
    %747 = vmatprep.subr.bf16.mxu0 0
    %748 = vmatpush2.bf16.msra.mxu0 0
    %749 = vmatprep.subr.bf16.mxu0 0
    %750 = vmatpush2.bf16.msra.mxu0 0
    %751 = vmatprep.subr.bf16.mxu0 0
    %752 = vmatpush2.bf16.msra.mxu0 0
    %753 = vmatprep.subr.bf16.mxu0 0
    %754 = vmatpush2.bf16.msra.mxu0 0
    %755 = vmatprep.subr.bf16.mxu0 0
    %756 = vmatpush2.bf16.msra.mxu0 0
    %757 = vmatprep.mubr.bf16.mxu0 0
    %758 = vmatmul.mubr.bf16.gmra.mxu0 %v723
    %v759 = vpop.f32.mrf.mxu0
    %v760 = vadd.f32 0.0, %v759
    %v761 = vpop.f32.mrf.mxu0
    %v762 = vadd.f32 0.0, %v761
    %v763 = vpop.f32.mrf.mxu0
    %v764 = vpop.f32.mrf.mxu0
    %765 = vdwg.mxu0
    %v766 = vadd.f32 %v716, %v760
    %v767 = vxor.u32 %v766, 2147483648
    %v768 = vmul.f32 %v767, 1.442695
    %v769 = vpow.pop %v768
    %v770 = vadd.f32 %v769, 1.0
    %v771 = vrcp.pop %v770
    %v772 = vmul.f32 1.0, %v771
    %v773 = vadd.f32 %v762, %v196
    %v774 = vmul.f32 %v772, %v773
    %v775 = vadd.f32 %v717, %v774
    %v776 = vtanh.pop %v775
    %v777 = vsub.f32 1.0, %v772
    %779 = vrot.lane.b32.xlu0 %v776, 64
    %v780 = vpop.permute.xlu0 %779
    %v782 = vmul.f32 %v777, %v780
    %v783 = vmul.f32 %v772, %v715
    %v784 = vadd.f32 %v782, %v783
    %v785 = vld [vmem:[#allocation3 + $0x48] sm:$0xf]
    %v786 = vld [vmem:[#allocation3 + $0x50] sm:$0xf]
    %v787 = vld [vmem:[#allocation3 + $0x58] sm:$0xf]
    %v788 = vld [vmem:[#allocation3 + $0x60] sm:$0xf]
    %v789 = vld [vmem:[#allocation3 + $0x68] sm:$0xf]
    %v790 = vld [vmem:[#allocation3 + $0x70] sm:$0xf]
    %v791 = vld [vmem:[#allocation3 + $0x78] sm:$0xf]
    %v792 = vld [vmem:[#allocation3 + $0x80] sm:$0xf]
    %v793 = vpack.c.bf16 %v784, %v784
    %v794 = vld [vmem:[%s1] sm:$0xff]
    %v795 = vld [vmem:[%s3 + $0x2] ss:$0 sm:$0xff]
    %797 = vset.pattern.permute.xlu0 0
    %798 = vperm.xlu0 %797, %v794
    %v799 = vpop.permute.xlu0 %798
    %v801 = vmul.f32 %v799, %v795
    %803 = vrot.lane.b32.xlu0 %v793, 64
    %v804 = vpop.permute.xlu0 %803
    %v813 = vunpack.c.l.b16 %v785
    %v814 = vunpack.c.l.b16 %v786
    %v815 = vunpack.c.l.b16 %v787
    %v816 = vunpack.c.l.b16 %v788
    %v817 = vunpack.c.l.b16 %v789
    %v818 = vunpack.c.l.b16 %v790
    %v819 = vunpack.c.l.b16 %v791
    %v820 = vunpack.c.l.b16 %v792
    %v821 = vpack.c.b16 %v814, %v813
    %v822 = vpack.c.b16 %v816, %v815
    %v823 = vpack.c.b16 %v818, %v817
    %v824 = vpack.c.b16 %v820, %v819
    %v830 = vsel %vm172, %v804, 0
    %832 = vmatprep.subr.bf16.mxu0 0
    %833 = vmatpush1.bf16.msra.mxu0 0
    %834 = vmatprep.subr.bf16.mxu0 0
    %835 = vmatpush1.bf16.msra.mxu0 0
    %836 = vmatprep.subr.bf16.mxu0 0
    %837 = vmatpush1.bf16.msra.mxu0 0
    %838 = vmatprep.subr.bf16.mxu0 0
    %839 = vmatpush1.bf16.msra.mxu0 0
    %840 = vmatprep.subr.bf16.mxu0 0
    %841 = vmatpush1.bf16.msra.mxu0 %v824
    %842 = vmatprep.subr.bf16.mxu0 0
    %843 = vmatpush1.bf16.msra.mxu0 %v823
    %844 = vmatprep.subr.bf16.mxu0 0
    %845 = vmatpush1.bf16.msra.mxu0 %v822
    %846 = vmatprep.subr.bf16.mxu0 0
    %847 = vmatpush1.bf16.msra.mxu0 %v821
    %848 = vmatprep.subr.bf16.mxu0 0
    %849 = vmatpush2.bf16.msra.mxu0 0
    %850 = vmatprep.subr.bf16.mxu0 0
    %851 = vmatpush2.bf16.msra.mxu0 0
    %852 = vmatprep.subr.bf16.mxu0 0
    %853 = vmatpush2.bf16.msra.mxu0 0
    %854 = vmatprep.subr.bf16.mxu0 0
    %855 = vmatpush2.bf16.msra.mxu0 0
    %856 = vmatprep.subr.bf16.mxu0 0
    %857 = vmatpush2.bf16.msra.mxu0 0
    %858 = vmatprep.subr.bf16.mxu0 0
    %859 = vmatpush2.bf16.msra.mxu0 0
    %860 = vmatprep.subr.bf16.mxu0 0
    %861 = vmatpush2.bf16.msra.mxu0 0
    %862 = vmatprep.subr.bf16.mxu0 0
    %863 = vmatpush2.bf16.msra.mxu0 0
    %864 = vmatprep.mubr.bf16.mxu0 0
    %865 = vmatmul.mubr.bf16.gmra.mxu0 %v830
    %v866 = vpop.f32.mrf.mxu0
    %v867 = vadd.f32 %v801, %v866
    %v868 = vpop.f32.mrf.mxu0
    %v869 = vpop.f32.mrf.mxu0
    %v870 = vpop.f32.mrf.mxu0
    %871 = vdwg.mxu0
    %v872 = vld [vmem:[%s3 + $0x3] ss:$0 sm:$0xff]
    %v873 = vadd.f32 %v867, %v872
    %v874 = vmax.f32 %v873, 0.0
    %v875 = vld [vmem:[%s3 + $0x4] ss:$0 sm:$0xff]
    %v876 = vmul.f32 %v874, %v875
    %vm877 = vcmask 261120
    %v878 = vsel %vm877, %v876, 0.0
    %879 = vadd.xlane.f32.xlu0 %v878
    %v880 = vpop.xlane.xlu0 %879
    %v881 = vld [vmem:[%s3 + $0x5] ss:$0 sm:$0xff]
    %v882 = vadd.f32 %v880, %v881
    %vm883 = vcmask 7168
    %884 = vst.msk [vmem:[%s4] sm:$0xff] %vm883, %v882
    // Predicated region
    $region22: #{gru_forward.1} parent=1 // pred_check
      _
    $region23: #{gru_forward.1} parent=1 // pred_check_branch
      %886 = sbr.rel (0) target = $region25
    $region24: #{gru_forward.1} parent=1 // pred_region
      _
    $region25: #{gru_forward.1} parent=1 // pred_fallthru
      _
    // Predicated region
    $region26: #{gru_forward.1} parent=1 // pred_check
      _
    $region27: #{gru_forward.1} parent=1 // pred_check_branch
      %888 = sbr.rel (0) target = $region29
    $region28: #{gru_forward.1} parent=1 // pred_region
      _
    $region29: #{gru_forward.1} parent=1 // pred_fallthru
      _
    %889 = vsyncpa [#allocation4], 1

</llo_original>
